<compile_context>
chip_gen: v7x
topology: tpu7x:2x2x1
jax: 0.10.0
libtpu: 0.0.40
codegen_flags: <defaults>
</compile_context>

<pallas_src>
import jax
import jax.numpy as jnp
from jax.experimental import pallas as pl
from jax.experimental.pallas import tpu as pltpu


def _attention_kernel(x_ref, w_ref, o_ref):
    # x_ref: (Bt, S, E) VMEM, w_ref: (1, E) VMEM, o_ref: (Bt, S) VMEM.
    x = x_ref[...].astype(jnp.float32)              # (Bt, S, E)
    w = w_ref[...].astype(jnp.float32)              # (1, E), broadcasts over (Bt, S)
    # Linear (bias dropped: softmax-invariant): VPU multiply + lane reduce over E.
    logits = jnp.sum(x * w, axis=-1)                # (Bt, S)
    # Numerically stable softmax over the sequence axis (lane axis here).
    m = jnp.max(logits, axis=-1, keepdims=True)     # (Bt, 1)
    e = jnp.exp(logits - m)                         # (Bt, S)
    s = jnp.sum(e, axis=-1, keepdims=True)          # (Bt, 1)
    o_ref[...] = (e / s).astype(o_ref.dtype)        # exact normalization


def _vmem_capacity_bytes():
    """Physical VMEM per core; fall back to the smallest (v7x, 64 MiB)."""
    try:
        return int(pltpu.get_tpu_info().vmem_capacity_bytes)
    except Exception:
        return 64 * 1024 * 1024


def _choose_block_batch(B, S, E, itemsize, budget):
    """Batch rows per grid step: biggest tile under `budget` bytes, keeping the
    (Bt, S) output block sublane-aligned (Bt % 8 == 0 or Bt == B) and
    preferring an even number of grid steps (v7x has 2 TensorCores)."""
    per_batch = max(1, S * E * itemsize)
    max_bt = max(1, budget // per_batch)
    if max_bt >= B:
        # Whole batch fits in one tile; split into two aligned blocks when
        # possible so a 2-TensorCore chip gets an even, balanced grid.
        if B % 16 == 0:
            return B // 2
        return B
    # Multiple grid steps: keep the output block a multiple of 8 sublanes.
    bt = (max_bt // 8) * 8 if max_bt >= 8 else max_bt
    # Best-effort: nudge toward an even grid (helps v7x, harmless elsewhere).
    if bt >= 16:
        steps = -(-B // bt)
        if steps > 1 and steps % 2 == 1 and -(-B // (bt - 8)) % 2 == 0:
            bt -= 8
    return bt


@jax.jit
def attention_forward(x, w, b=None):
    """x: (B, S, E), w: (E, 1), b: (1, 1) (unused: softmax-invariant).

    Returns (B, S, 1) attention weights, softmax over the sequence axis S,
    matching the PyTorch module.  x may be bf16 or f32; the kernel upcasts
    per-tile, so callers should keep x in bf16 when possible (halves the
    HBM read of this bandwidth-bound op).
    """
    del b  # Linear bias is a no-op under softmax over S.
    B, S, E = x.shape
    itemsize = x.dtype.itemsize

    cap = _vmem_capacity_bytes()
    budget = cap // 4                       # per-input-buffer budget (x is double-buffered)
    Bt = _choose_block_batch(B, S, E, itemsize, budget)
    tile_bytes = Bt * S * E * itemsize
    # Scope: 2x tile (double buffering) + slack, clamped under physical VMEM.
    vmem_limit = int(min((7 * cap) // 8,
                         max(2 * tile_bytes + (4 << 20), 32 << 20)))

    w_row = w.reshape(1, E)  # lane-dense weight layout for the VPU multiply

    # TODO(synk): for a single (1, S, E) row exceeding the VMEM budget, add an
    # E-chunked path (partial-sum the logits over E slabs with a fori_loop so
    # the softmax over S stays single-pass and lane-dense).
    out2d = pl.pallas_call(
        _attention_kernel,
        out_shape=jax.ShapeDtypeStruct((B, S), x.dtype),
        grid_spec=pltpu.PrefetchScalarGridSpec(
            num_scalar_prefetch=0,
            grid=(pl.cdiv(B, Bt),),
            in_specs=[
                pl.BlockSpec((Bt, S, E), lambda i: (i, 0, 0)),
                pl.BlockSpec((1, E), lambda i: (0, 0)),
            ],
            out_specs=pl.BlockSpec((Bt, S), lambda i: (i, 0)),
        ),
        compiler_params=pltpu.CompilerParams(
            dimension_semantics=("parallel",),
            vmem_limit_bytes=vmem_limit,
        ),
    )(x, w_row)

    # Expand back to the PyTorch output layout (B, S, 1).  Consumers that only
    # broadcast the weights against x can use the (B, S) result directly.
    return out2d[..., None]


def reference_forward(x, w, b):
    logits = jnp.einsum("bse,eo->bso", x, w) + b[0, 0]
    return jax.nn.softmax(logits, axis=1)


if __name__ == "__main__":
    B, S, E = 2, 8, 32
    key = jax.random.PRNGKey(0)
    kx, kw, kb = jax.random.split(key, 3)

    x = jax.random.normal(kx, (B, S, E), dtype=jnp.float32)

    # Deterministic parameter init (mimics nn.Linear default uniform init).
    bound = 1.0 / (E ** 0.5)
    w = jax.random.uniform(kw, (E, 1), dtype=jnp.float32, minval=-bound, maxval=bound)
    b = jax.random.uniform(kb, (1, 1), dtype=jnp.float32, minval=-bound, maxval=bound)

    out = jax.block_until_ready(attention_forward(x, w, b))
    ref = reference_forward(x, w, b)

    assert out.shape == (B, S, 1), out.shape
    assert jnp.allclose(out, ref, atol=1e-4, rtol=1e-4), "mismatch vs reference"
    # Softmax over the sequence axis must sum to ~1 per batch (exact division now).
    assert jnp.allclose(jnp.sum(out, axis=1), 1.0, atol=1e-4)

    print("KERNEL_OK")
</pallas_src>

<mosaic_0001>
module attributes {stable_mosaic.version = 11 : i64} {
  func.func @_attention_kernel(%arg0: i32, %arg1: memref<2x8x32xf32, #tpu.memory_space<vmem>>, %arg2: memref<1x32xf32, #tpu.memory_space<vmem>>, %arg3: memref<2x8xf32, #tpu.memory_space<vmem>>) attributes {dimension_semantics = [#tpu.dimension_semantics<parallel>], iteration_bounds = array<i64: 1>, scalar_prefetch = 0 : i64, scratch_operands = 0 : i64, tpu.core_type = #tpu.core_type<tc>, window_params = [{transform_indices = @transform_0, window_bounds = array<i64: 2, 8, 32>}, {pipeline_mode = #tpu.pipeline_mode<synchronous>, transform_indices = @transform_1, window_bounds = array<i64: 1, 32>}, {transform_indices = @transform_2, window_bounds = array<i64: 2, 8>}]} {
    %c0 = arith.constant 0 : index
    %c0_0 = arith.constant 0 : index
    %c0_1 = arith.constant 0 : index
    %0 = vector.load %arg1[%c0, %c0_0, %c0_1] : memref<2x8x32xf32, #tpu.memory_space<vmem>>, vector<2x8x32xf32>
    %c0_2 = arith.constant 0 : index
    %c0_3 = arith.constant 0 : index
    %1 = vector.load %arg2[%c0_2, %c0_3] : memref<1x32xf32, #tpu.memory_space<vmem>>, vector<1x32xf32>
    %2 = vector.shape_cast %1 : vector<1x32xf32> to vector<1x1x32xf32>
    %3 = vector.broadcast %2 : vector<1x1x32xf32> to vector<2x8x32xf32>
    %4 = arith.mulf %0, %3 : vector<2x8x32xf32>
    %cst = arith.constant dense<0.000000e+00> : vector<2x8xf32>
    %5 = vector.multi_reduction <add>, %4, %cst [2] : vector<2x8x32xf32> to vector<2x8xf32>
    %cst_4 = arith.constant dense<0xFF800000> : vector<2xf32>
    %6 = vector.multi_reduction <maximumf>, %5, %cst_4 [1] : vector<2x8xf32> to vector<2xf32>
    %7 = vector.shape_cast %6 : vector<2xf32> to vector<2x1xf32>
    %8 = vector.broadcast %7 : vector<2x1xf32> to vector<2x8xf32>
    %9 = arith.subf %5, %8 : vector<2x8xf32>
    %10 = math.exp %9 : vector<2x8xf32>
    %cst_5 = arith.constant dense<0.000000e+00> : vector<2xf32>
    %11 = vector.multi_reduction <add>, %10, %cst_5 [1] : vector<2x8xf32> to vector<2xf32>
    %12 = vector.shape_cast %11 : vector<2xf32> to vector<2x1xf32>
    %13 = vector.broadcast %12 : vector<2x1xf32> to vector<2x8xf32>
    %14 = arith.divf %10, %13 : vector<2x8xf32>
    %c0_6 = arith.constant 0 : index
    %c0_7 = arith.constant 0 : index
    %15 = vector.load %arg3[%c0_6, %c0_7] : memref<2x8xf32, #tpu.memory_space<vmem>>, vector<2x8xf32>
    tpu.vector_store %arg3[%c0_6, %c0_7], %14 {strides = array<i32>} : memref<2x8xf32, #tpu.memory_space<vmem>>, vector<2x8xf32>,
    return
  }
  func.func @transform_0(%arg0: i32) -> (i32, i32, i32) {
    %c0_i32 = arith.constant 0 : i32
    %c0_i32_0 = arith.constant 0 : i32
    %c0_i32_1 = arith.constant 0 : i32
    return %arg0, %c0_i32, %c0_i32_0 : i32, i32, i32
  }
  func.func @transform_1(%arg0: i32) -> (i32, i32) {
    %c0_i32 = arith.constant 0 : i32
    %c0_i32_0 = arith.constant 0 : i32
    %c0_i32_1 = arith.constant 0 : i32
    return %c0_i32, %c0_i32_0 : i32, i32
  }
  func.func @transform_2(%arg0: i32) -> (i32, i32) {
    %c0_i32 = arith.constant 0 : i32
    %c0_i32_0 = arith.constant 0 : i32
    return %arg0, %c0_i32 : i32, i32
  }
}

</mosaic_0001>

<llo_original>
// kernel: attention_forward.1
$region0: #{attention_forward.1}
  #allocation0 [shape = 'u32[]', space=smem, size = 0x4, offset = 0x4, fixed_abs, tag = 'smem constant byte address 0x4 - core index']
  #allocation1 [shape = 'u32[144,128]{1,0:T(1,128)}', space=vmem, size = 0x12000, scoped, tag = 'internal scratch']
  %s0 = inlined_call_operand.hbm [shape: f32[2,8,32], index: 0, kind: input, shape index: {}]
  %s1 = inlined_call_operand.vmem [shape: f32[1,32], index: 1, kind: input, shape index: {}]
  %s2 = inlined_call_operand.hbm [shape: f32[2,8], index: 2, kind: output, shape index: {}]
  %s3 = sld [smem:[#allocation0]]
  $region22: #{attention_forward.1} parent=0
    _
  %s5 = ssub.s32 1, %s3
  %s6 = scalar_select 0, %s5, %s3
  $region1: #{attention_forward.1} parent=0
    #allocation2 [shape = 'u8[8192]{0}', space=vmem, size = 0x2000, scoped, tag = 'input window, operand 0, single buffered']
    #allocation3 [shape = 's32[1]{0}', space=sflag, size = 0x4, scoped, tag = 'scoped memory for attention_forward.1']
    #allocation4 [shape = 's32[1]{0}', space=sflag, size = 0x4, scoped, tag = 'scoped memory for attention_forward.1']
    #allocation5 [shape = 'u8[1024]{0}', space=vmem, size = 0x400, scoped, tag = 'output window, operand 0, single buffered']
    %7 = vsyncpa [#allocation3], 0
    %8 = vsyncpa [#allocation4], 0
    // Predicated region
    $region2: #{attention_forward.1} parent=1 // pred_check
      _
    $region3: #{attention_forward.1} parent=1 // pred_check_branch
      %10 = sbr.rel (0) target = $region5
    $region4: #{attention_forward.1} parent=1 // pred_region
      %s12 = ssub.s32 256, 256
      %13 = vsyncadd [#allocation3], %s12
      %s14 = sshll.u32 [#allocation2], 4
      %s15 = int_to_ptr.vmem [resolvable:$true] %s14
      %20 = dma.hbm_to_vmem [thread:$0]  %s0, 256, %s15, [#allocation3], 128, 128, 8
    $region5: #{attention_forward.1} parent=1 // pred_fallthru
      _
    // Predicated region
    $region6: #{attention_forward.1} parent=1 // pred_check
      _
    $region7: #{attention_forward.1} parent=1 // pred_check_branch
      %22 = sbr.rel (0) target = $region9
    $region8: #{attention_forward.1} parent=1 // pred_region
      _
    $region9: #{attention_forward.1} parent=1 // pred_fallthru
      _
    // Predicated region
    $region10: #{attention_forward.1} parent=1 // pred_check
      _
    $region11: #{attention_forward.1} parent=1 // pred_check_branch
      %24 = sbr.rel (0) target = $region13
    $region12: #{attention_forward.1} parent=1 // pred_region
      %25 = dma.done [#allocation3], 256
    $region13: #{attention_forward.1} parent=1 // pred_fallthru
      _
    %v26 = vld [vmem:[#allocation2] sm:$0xff]
    %v27 = vld [vmem:[#allocation2 + $0x8] sm:$0xff]
    %v28 = vld [vmem:[%s1] sm:$0x1]
    %v30 = vlaneseq
    %v31 = vshrl.u32 %v30, 7
    %v32 = vsub.s32 0, %v31
    %v33 = vrot.slane %v28, %v32
    %v35 = vmul.f32 %v26, %v33
    %v36 = vmul.f32 %v27, %v33
    %vm37 = vcmask 261120
    %v38 = vsel %vm37, %v35, 0.0
    %39 = vadd.xlane.f32.xlu0 %v38
    %v40 = vpop.xlane.xlu0 %39
    %v41 = vsel %vm37, %v36, 0.0
    %42 = vadd.xlane.f32.xlu0 %v41
    %v43 = vpop.xlane.xlu0 %42
    %v46 = vlaneseq
    %v47 = vand.u32 %v46, 127
    %v48 = vlaneseq
    %v49 = vshrl.u32 %v48, 7
    %v50 = vsub.s32 %v47, %v49
    %v51 = vrot.slane %v40, %v50
    %v52 = vlaneseq
    %v53 = vshrl.u32 %v52, 7
    %v54 = vsub.s32 %v47, %v53
    %v55 = vrot.slane %v43, %v54
    %vm56 = vcmask 1041409
    %v57 = vsel %vm56, %v55, %v51
    %vm59 = vcmask 58368
    %v60 = vsel %vm59, %v57, -inf
    %61 = vmax.xlane.f32.xlu0 %v60
    %v62 = vpop.xlane.xlu0 %61
    %v64 = vlaneseq
    %v65 = vshrl.u32 %v64, 7
    %v66 = vsub.s32 0, %v65
    %v67 = vrot.slane %v62, %v66
    %v68 = vlaneseq
    %v69 = vshrl.u32 %v68, 7
    %v70 = vsub.s32 1, %v69
    %v71 = vrot.slane %v62, %v70
    %v74 = vsub.f32 %v40, %v67
    %v75 = vsub.f32 %v43, %v71
    %v76 = vmul.f32 %v74, 1.442695
    %v77 = vpow.pop %v76
    %v78 = vmul.f32 %v75, 1.442695
    %v79 = vpow.pop %v78
    %82 = vset.pattern.permute.xlu0 0
    %83 = vperm.xlu0 %82, %v77
    %v84 = vpop.permute.xlu0 %83
    %85 = vset.pattern.permute.xlu0 0
    %86 = vperm.xlu0 %85, %v79
    %v87 = vpop.permute.xlu0 %86
    %v88 = vlaneseq
    %v89 = vshrl.u32 %v88, 7
    %v90 = vsub.s32 %v47, %v89
    %v91 = vrot.slane %v84, %v90
    %v92 = vlaneseq
    %v93 = vshrl.u32 %v92, 7
    %v94 = vsub.s32 %v47, %v93
    %v95 = vrot.slane %v87, %v94
    %v96 = vsel %vm56, %v95, %v91
    %v98 = vsel %vm59, %v96, 0.0
    %99 = vadd.xlane.f32.xlu0 %v98
    %v100 = vpop.xlane.xlu0 %99
    %v102 = vlaneseq
    %v103 = vshrl.u32 %v102, 7
    %v104 = vsub.s32 0, %v103
    %v105 = vrot.slane %v100, %v104
    %v106 = vlaneseq
    %v107 = vshrl.u32 %v106, 7
    %v108 = vsub.s32 1, %v107
    %v109 = vrot.slane %v100, %v108
    %v112 = vrcp.pop %v105
    %v113 = vmul.f32 %v77, %v112
    %v114 = vrcp.pop %v109
    %v115 = vmul.f32 %v79, %v114
    %118 = vset.pattern.permute.xlu0 0
    %119 = vperm.xlu0 %118, %v113
    %v120 = vpop.permute.xlu0 %119
    %121 = vset.pattern.permute.xlu0 0
    %122 = vperm.xlu0 %121, %v115
    %v123 = vpop.permute.xlu0 %122
    %v124 = vlaneseq
    %v125 = vshrl.u32 %v124, 7
    %v126 = vsub.s32 %v47, %v125
    %v127 = vrot.slane %v120, %v126
    %v128 = vlaneseq
    %v129 = vshrl.u32 %v128, 7
    %v130 = vsub.s32 %v47, %v129
    %v131 = vrot.slane %v123, %v130
    %v132 = vsel %vm56, %v131, %v127
    %134 = vst.msk [vmem:[#allocation5] sm:$0x3] %vm59, %v132
    // Predicated region
    $region14: #{attention_forward.1} parent=1 // pred_check
      _
    $region15: #{attention_forward.1} parent=1 // pred_check_branch
      %136 = sbr.rel (0) target = $region17
    $region16: #{attention_forward.1} parent=1 // pred_region
      %s138 = ssub.s32 32, 32
      %139 = vsyncadd [#allocation4], %s138
      %s141 = sshll.u32 [#allocation5], 4
      %s142 = int_to_ptr.vmem [resolvable:$true] %s141
      %144 = dma.vmem_to_hbm [thread:$0]  %s142, 32, %s2, [#allocation4]
    $region17: #{attention_forward.1} parent=1 // pred_fallthru
      _
    // Predicated region
    $region18: #{attention_forward.1} parent=1 // pred_check
      _
    $region19: #{attention_forward.1} parent=1 // pred_check_branch
      %146 = sbr.rel (0) target = $region21
    $region20: #{attention_forward.1} parent=1 // pred_region
      %147 = dma.done [#allocation4], 32
    $region21: #{attention_forward.1} parent=1 // pred_fallthru
      _
    %148 = vsyncpa [#allocation3], 1
    %149 = vsyncpa [#allocation4], 1

</llo_original>
